<compile_context>
chip_gen: v7x
topology: tpu7x:2x2x1
jax: 0.10.0
libtpu: 0.0.40
codegen_flags: <defaults>
</compile_context>

<pallas_src>
import jax
import jax.numpy as jnp
import numpy as np
from jax.experimental import pallas as pl
from jax.experimental.pallas import tpu as pltpu

# ---- small shapes consistent with Caser.__init__ ----
B = 4           # batch
L = 8           # MAX_ITEM_LIST_LENGTH
D = 32          # embedding_size
N_V = 4         # vertical conv out-channels
N_H = 16        # horizontal conv out-channels (per kernel height)
N_ITEMS = 50
N_USERS = 20

BP = 8          # batch padded to a full sublane group
LNH = L * N_H   # 128  horizontal feature width
NVD = N_V * D   # 128  vertical feature width
C_ALL = LNH + NVD   # 256 combined conv output width
DP = 128        # lane-padded FC output width (real = D)
NEG = -1.0e30   # additive mask; ReLU clamps it to 0


def caser_kernel(emb_ref, user_ref, wcomb_ref, bcomb_ref, mbias_ref,
                 w1_ref, b1_ref, w2z_ref, w2u_ref, b2_ref, out_ref):
    # ---- in-kernel im2col: window t = lanes [t*D, t*D + L*D) of the padded seq
    x = emb_ref[...]                                           # (BP, 2*L*D) bf16
    windows = jnp.concatenate(
        [x[:, t * D: t * D + L * D] for t in range(L)], axis=0)  # (L*BP, L*D)

    # ---- one fused matmul: all horizontal kernel heights + vertical conv ----
    s = jnp.dot(windows, wcomb_ref[...],
                preferred_element_type=jnp.float32) + bcomb_ref[...]  # (L*BP, C_ALL)

    # vertical conv = t=0 window rows, no activation (matches reference)
    out_v = s[0:BP, LNH:]                                      # (BP, N_V*D)

    # horizontal convs: additive -1e30 mask for invalid (t, kernel) slots,
    # ReLU (ac_conv), then max-pool over the L sliding positions.
    h = jnp.maximum(s[:, :LNH] + mbias_ref[...], 0.0)          # (L*BP, L*N_H)
    pooled = jnp.max(h.reshape(L, BP, LNH), axis=0)            # (BP, L*N_H)

    # ---- fc1 + ReLU on concat([out_v, out_h])  (dropout p=0.5 is identity) ----
    # TODO(synk): training-mode dropout is not implemented (inference semantics).
    feat = jnp.concatenate([out_v, pooled], axis=1).astype(jnp.bfloat16)  # (BP, 256)
    z = jnp.maximum(
        jnp.dot(feat, w1_ref[...], preferred_element_type=jnp.float32) + b1_ref[...],
        0.0)                                                   # (BP, DP)

    # ---- fc2 on concat([z, user_emb]) + ReLU (split weights == concat) ----
    o = (jnp.dot(z.astype(jnp.bfloat16), w2z_ref[...],
                 preferred_element_type=jnp.float32)
         + jnp.dot(user_ref[...], w2u_ref[...],
                   preferred_element_type=jnp.float32)
         + b2_ref[...])
    out_ref[...] = jnp.maximum(o, 0.0)                         # (BP, DP) lane-dense


def _full_spec(shape):
    n = len(shape)
    return pl.BlockSpec(shape, lambda i, _n=n: (0,) * _n)


@jax.jit
def caser_pallas(emb_flat, user_p, wcomb, bcomb, mbias, w1p, b1p, w2zp, w2up, b2p):
    args = (emb_flat, user_p, wcomb, bcomb, mbias, w1p, b1p, w2zp, w2up, b2p)
    return pl.pallas_call(
        caser_kernel,
        out_shape=jax.ShapeDtypeStruct((BP, DP), jnp.float32),
        grid=(1,),
        in_specs=[_full_spec(a.shape) for a in args],
        out_specs=_full_spec((BP, DP)),
        compiler_params=pltpu.CompilerParams(
            dimension_semantics=("arbitrary",)),
    )(*args)


def init_params(key):
    ks = jax.random.split(key, 8 + 2 * L)
    std = 0.1
    p = {}
    p["item_emb"] = std * jax.random.normal(ks[0], (N_ITEMS, D), jnp.float32)
    p["user_emb"] = std * jax.random.normal(ks[1], (N_USERS, D), jnp.float32)
    p["conv_v_w"] = std * jax.random.normal(ks[2], (N_V, 1, L, 1), jnp.float32)
    p["conv_v_b"] = std * jax.random.normal(ks[3], (N_V,), jnp.float32)
    p["conv_h_w"] = [std * jax.random.normal(ks[8 + i], (N_H, 1, i + 1, D), jnp.float32)
                     for i in range(L)]
    p["conv_h_b"] = [std * jax.random.normal(ks[8 + L + i], (N_H,), jnp.float32)
                     for i in range(L)]
    p["fc1_w"] = std * jax.random.normal(ks[4], (D, N_V * D + N_H * L), jnp.float32)
    p["fc1_b"] = jnp.zeros((D,), jnp.float32)
    p["fc2_w"] = std * jax.random.normal(ks[5], (D, 2 * D), jnp.float32)
    p["fc2_b"] = jnp.zeros((D,), jnp.float32)
    return p


def caser_forward(p, user, item_seq):
    # --- glue: embedding gathers (host-side XLA gather), batch pad to BP ---
    # TODO(synk): embedding gathers could be pulled in-kernel via scalar-prefetch
    #             indices; kept host-side for robustness at these tiny shapes.
    emb = p["item_emb"][item_seq]                      # (B, L, D)
    user_emb = p["user_emb"][user]                     # (B, D); .squeeze(1) is a no-op
    emb3 = jnp.zeros((BP, 2 * L, D), jnp.float32).at[:B, :L, :].set(emb)
    emb_flat = emb3.reshape(BP, 2 * L * D).astype(jnp.bfloat16)   # (BP, 512)
    user_p = (jnp.zeros((BP, D), jnp.float32).at[:B].set(user_emb)
              ).astype(jnp.bfloat16)                              # (BP, 32)

    # --- glue: pack conv weights into one combined matmul weight ---
    # horizontal: kernel height i occupies rows [0, i*D) of its (L*D, N_H) block
    wh = jnp.zeros((L * N_H, L * D), jnp.float32)
    for idx in range(L):
        i = idx + 1
        blk = p["conv_h_w"][idx][:, 0].reshape(N_H, i * D)
        wh = wh.at[idx * N_H:(idx + 1) * N_H, :i * D].set(blk)
    wh_t = wh.T                                        # (L*D, L*N_H)
    bh = jnp.concatenate(p["conv_h_b"])[None, :]       # (1, L*N_H)

    # vertical: eye-Kronecker expansion of the (N_V, L) kernel
    Wv = p["conv_v_w"][:, 0, :, 0]                     # (N_V, L)
    wve = (Wv[:, None, :, None] *
           jnp.eye(D, dtype=jnp.float32)[None, :, None, :]).reshape(N_V * D, L * D)
    wve_t = wve.T                                      # (L*D, N_V*D)
    bve = jnp.repeat(p["conv_v_b"], D)[None, :]        # (1, N_V*D)

    wcomb = jnp.concatenate([wh_t, wve_t], axis=1).astype(jnp.bfloat16)  # (256, 256)
    bcomb = jnp.concatenate([bh, bve], axis=1)                            # (1, 256) f32

    # additive validity mask: -1e30 where sliding position t is out of range
    tpos = jnp.arange(L)[:, None]                      # sliding position t
    klen = jnp.repeat(jnp.arange(1, L + 1), N_H)[None, :]
    maskrow = jnp.where(tpos + klen <= L, 0.0, NEG).astype(jnp.float32)   # (L, L*N_H)
    mbias = jnp.repeat(maskrow, BP, axis=0)                               # (L*BP, L*N_H)

    # fc1 / fc2 weights: transposed, output dim zero-padded to 128 lanes
    w1p = (jnp.zeros((C_ALL, DP), jnp.float32)
           .at[:, :D].set(p["fc1_w"].T)).astype(jnp.bfloat16)             # (256, 128)
    b1p = jnp.zeros((1, DP), jnp.float32).at[0, :D].set(p["fc1_b"])
    w2zp = (jnp.zeros((DP, DP), jnp.float32)
            .at[:D, :D].set(p["fc2_w"][:, :D].T)).astype(jnp.bfloat16)    # (128, 128)
    w2up = (jnp.zeros((D, DP), jnp.float32)
            .at[:, :D].set(p["fc2_w"][:, D:].T)).astype(jnp.bfloat16)     # (32, 128)
    b2p = jnp.zeros((1, DP), jnp.float32).at[0, :D].set(p["fc2_b"])

    out_full = caser_pallas(emb_flat, user_p, wcomb, bcomb, mbias,
                            w1p, b1p, w2zp, w2up, b2p)
    return out_full[:B, :D]


def caser_reference(p, user, item_seq):
    """Pure-JAX reference, faithful to the PyTorch forward."""
    emb = p["item_emb"][item_seq]                      # (B, L, D)
    user_emb = p["user_emb"][user]                     # (B, D)
    Wv = p["conv_v_w"][:, 0, :, 0]                     # (N_V, L)
    out_v = jnp.einsum("cl,bld->bcd", Wv, emb) + p["conv_v_b"][None, :, None]
    out_v = out_v.reshape(B, N_V * D)
    outs = []
    for idx in range(L):
        i = idx + 1
        w = p["conv_h_w"][idx][:, 0]                   # (N_H, i, D)
        b = p["conv_h_b"][idx]
        conv_out = jnp.stack(
            [jnp.einsum("cjd,bjd->bc", w, emb[:, t:t + i, :])
             for t in range(L - i + 1)], axis=2) + b[None, :, None]
        conv_out = jnp.maximum(conv_out, 0.0)
        outs.append(jnp.max(conv_out, axis=2))         # max_pool1d + squeeze
    out_h = jnp.concatenate(outs, axis=1)              # (B, L*N_H)
    out = jnp.concatenate([out_v, out_h], axis=1)
    z = jnp.maximum(out @ p["fc1_w"].T + p["fc1_b"], 0.0)
    x = jnp.concatenate([z, user_emb], axis=1)
    return jnp.maximum(x @ p["fc2_w"].T + p["fc2_b"], 0.0)


if __name__ == "__main__":
    key = jax.random.PRNGKey(0)
    kp, ku, ki = jax.random.split(key, 3)
    params = init_params(kp)
    user = jax.random.randint(ku, (B,), 0, N_USERS, dtype=jnp.int32)
    item_seq = jax.random.randint(ki, (B, L), 0, N_ITEMS, dtype=jnp.int32)

    out = caser_forward(params, user, item_seq)
    out = jax.block_until_ready(out)

    ref = jax.block_until_ready(caser_reference(params, user, item_seq))
    np.testing.assert_allclose(np.asarray(out), np.asarray(ref),
                               rtol=5e-2, atol=1e-2)
    print("KERNEL_OK")
</pallas_src>

<mosaic_0001>
module attributes {stable_mosaic.version = 11 : i64} {
  func.func @caser_kernel(%arg0: i32, %arg1: memref<8x512xbf16, #tpu.memory_space<vmem>>, %arg2: memref<8x32xbf16, #tpu.memory_space<vmem>>, %arg3: memref<256x256xbf16, #tpu.memory_space<vmem>>, %arg4: memref<1x256xf32, #tpu.memory_space<vmem>>, %arg5: memref<64x128xf32, #tpu.memory_space<vmem>>, %arg6: memref<256x128xbf16, #tpu.memory_space<vmem>>, %arg7: memref<1x128xf32, #tpu.memory_space<vmem>>, %arg8: memref<128x128xbf16, #tpu.memory_space<vmem>>, %arg9: memref<32x128xbf16, #tpu.memory_space<vmem>>, %arg10: memref<1x128xf32, #tpu.memory_space<vmem>>, %arg11: memref<8x128xf32, #tpu.memory_space<vmem>>) attributes {dimension_semantics = [#tpu.dimension_semantics<arbitrary>], iteration_bounds = array<i64: 1>, scalar_prefetch = 0 : i64, scratch_operands = 0 : i64, tpu.core_type = #tpu.core_type<tc>, window_params = [{pipeline_mode = #tpu.pipeline_mode<synchronous>, transform_indices = @transform_0, window_bounds = array<i64: 8, 512>}, {pipeline_mode = #tpu.pipeline_mode<synchronous>, transform_indices = @transform_1, window_bounds = array<i64: 8, 32>}, {pipeline_mode = #tpu.pipeline_mode<synchronous>, transform_indices = @transform_2, window_bounds = array<i64: 256, 256>}, {pipeline_mode = #tpu.pipeline_mode<synchronous>, transform_indices = @transform_3, window_bounds = array<i64: 1, 256>}, {pipeline_mode = #tpu.pipeline_mode<synchronous>, transform_indices = @transform_4, window_bounds = array<i64: 64, 128>}, {pipeline_mode = #tpu.pipeline_mode<synchronous>, transform_indices = @transform_5, window_bounds = array<i64: 256, 128>}, {pipeline_mode = #tpu.pipeline_mode<synchronous>, transform_indices = @transform_6, window_bounds = array<i64: 1, 128>}, {pipeline_mode = #tpu.pipeline_mode<synchronous>, transform_indices = @transform_7, window_bounds = array<i64: 128, 128>}, {pipeline_mode = #tpu.pipeline_mode<synchronous>, transform_indices = @transform_8, window_bounds = array<i64: 32, 128>}, {pipeline_mode = #tpu.pipeline_mode<synchronous>, transform_indices = @transform_9, window_bounds = array<i64: 1, 128>}, {pipeline_mode = #tpu.pipeline_mode<synchronous>, transform_indices = @transform_10, window_bounds = array<i64: 8, 128>}]} {
    %c0 = arith.constant 0 : index
    %c0_0 = arith.constant 0 : index
    %0 = vector.load %arg1[%c0, %c0_0] : memref<8x512xbf16, #tpu.memory_space<vmem>>, vector<8x512xbf16>
    %1 = vector.extract_strided_slice %0 {offsets = [0, 0], sizes = [8, 256], strides = [1, 1]} : vector<8x512xbf16> to vector<8x256xbf16>
    %2 = vector.extract_strided_slice %0 {offsets = [0, 32], sizes = [8, 256], strides = [1, 1]} : vector<8x512xbf16> to vector<8x256xbf16>
    %3 = vector.extract_strided_slice %0 {offsets = [0, 64], sizes = [8, 256], strides = [1, 1]} : vector<8x512xbf16> to vector<8x256xbf16>
    %4 = vector.extract_strided_slice %0 {offsets = [0, 96], sizes = [8, 256], strides = [1, 1]} : vector<8x512xbf16> to vector<8x256xbf16>
    %5 = vector.extract_strided_slice %0 {offsets = [0, 128], sizes = [8, 256], strides = [1, 1]} : vector<8x512xbf16> to vector<8x256xbf16>
    %6 = vector.extract_strided_slice %0 {offsets = [0, 160], sizes = [8, 256], strides = [1, 1]} : vector<8x512xbf16> to vector<8x256xbf16>
    %7 = vector.extract_strided_slice %0 {offsets = [0, 192], sizes = [8, 256], strides = [1, 1]} : vector<8x512xbf16> to vector<8x256xbf16>
    %8 = vector.extract_strided_slice %0 {offsets = [0, 224], sizes = [8, 256], strides = [1, 1]} : vector<8x512xbf16> to vector<8x256xbf16>
    %9 = tpu.concatenate %1, %2, %3, %4, %5, %6, %7, %8 in 0 : vector<8x256xbf16>, vector<8x256xbf16>, vector<8x256xbf16>, vector<8x256xbf16>, vector<8x256xbf16>, vector<8x256xbf16>, vector<8x256xbf16>, vector<8x256xbf16> -> vector<64x256xbf16>
    %c0_1 = arith.constant 0 : index
    %c0_2 = arith.constant 0 : index
    %10 = vector.load %arg3[%c0_1, %c0_2] : memref<256x256xbf16, #tpu.memory_space<vmem>>, vector<256x256xbf16>
    %cst = arith.constant dense<0.000000e+00> : vector<64x256xf32>
    %11 = tpu.matmul %9, %10, %cst {dimension_numbers = #tpu.dot_dimension_numbers<[1], [0], [0], [1], [0, 0, 1, 1], [], []>} : vector<64x256xbf16>, vector<256x256xbf16>, vector<64x256xf32> -> vector<64x256xf32>
    %c0_3 = arith.constant 0 : index
    %c0_4 = arith.constant 0 : index
    %12 = vector.load %arg4[%c0_3, %c0_4] : memref<1x256xf32, #tpu.memory_space<vmem>>, vector<1x256xf32>
    %13 = vector.broadcast %12 : vector<1x256xf32> to vector<64x256xf32>
    %14 = arith.addf %11, %13 : vector<64x256xf32>
    %15 = vector.extract_strided_slice %14 {offsets = [0, 128], sizes = [8, 128], strides = [1, 1]} : vector<64x256xf32> to vector<8x128xf32>
    %16 = vector.extract_strided_slice %14 {offsets = [0, 0], sizes = [64, 128], strides = [1, 1]} : vector<64x256xf32> to vector<64x128xf32>
    %c0_5 = arith.constant 0 : index
    %c0_6 = arith.constant 0 : index
    %17 = vector.load %arg5[%c0_5, %c0_6] : memref<64x128xf32, #tpu.memory_space<vmem>>, vector<64x128xf32>
    %18 = arith.addf %16, %17 : vector<64x128xf32>
    %cst_7 = arith.constant 0.000000e+00 : f32
    %19 = vector.broadcast %cst_7 : f32 to vector<64x128xf32>
    %20 = arith.maximumf %18, %19 : vector<64x128xf32>
    %21 = vector.shape_cast %20 : vector<64x128xf32> to vector<8x8x128xf32>
    %cst_8 = arith.constant dense<0xFF800000> : vector<8x128xf32>
    %22 = vector.multi_reduction <maximumf>, %21, %cst_8 [0] : vector<8x8x128xf32> to vector<8x128xf32>
    %23 = tpu.concatenate %15, %22 in 1 : vector<8x128xf32>, vector<8x128xf32> -> vector<8x256xf32>
    %24 = arith.truncf %23 : vector<8x256xf32> to vector<8x256xbf16>
    %c0_9 = arith.constant 0 : index
    %c0_10 = arith.constant 0 : index
    %25 = vector.load %arg6[%c0_9, %c0_10] : memref<256x128xbf16, #tpu.memory_space<vmem>>, vector<256x128xbf16>
    %cst_11 = arith.constant dense<0.000000e+00> : vector<8x128xf32>
    %26 = tpu.matmul %24, %25, %cst_11 {dimension_numbers = #tpu.dot_dimension_numbers<[1], [0], [0], [1], [0, 0, 1, 1], [], []>} : vector<8x256xbf16>, vector<256x128xbf16>, vector<8x128xf32> -> vector<8x128xf32>
    %c0_12 = arith.constant 0 : index
    %c0_13 = arith.constant 0 : index
    %27 = vector.load %arg7[%c0_12, %c0_13] : memref<1x128xf32, #tpu.memory_space<vmem>>, vector<1x128xf32>
    %28 = vector.broadcast %27 : vector<1x128xf32> to vector<8x128xf32>
    %29 = arith.addf %26, %28 : vector<8x128xf32>
    %cst_14 = arith.constant 0.000000e+00 : f32
    %30 = vector.broadcast %cst_14 : f32 to vector<8x128xf32>
    %31 = arith.maximumf %29, %30 : vector<8x128xf32>
    %32 = arith.truncf %31 : vector<8x128xf32> to vector<8x128xbf16>
    %c0_15 = arith.constant 0 : index
    %c0_16 = arith.constant 0 : index
    %33 = vector.load %arg8[%c0_15, %c0_16] : memref<128x128xbf16, #tpu.memory_space<vmem>>, vector<128x128xbf16>
    %cst_17 = arith.constant dense<0.000000e+00> : vector<8x128xf32>
    %34 = tpu.matmul %32, %33, %cst_17 {dimension_numbers = #tpu.dot_dimension_numbers<[1], [0], [0], [1], [0, 0, 1, 1], [], []>} : vector<8x128xbf16>, vector<128x128xbf16>, vector<8x128xf32> -> vector<8x128xf32>
    %c0_18 = arith.constant 0 : index
    %c0_19 = arith.constant 0 : index
    %35 = vector.load %arg2[%c0_18, %c0_19] : memref<8x32xbf16, #tpu.memory_space<vmem>>, vector<8x32xbf16>
    %c0_20 = arith.constant 0 : index
    %c0_21 = arith.constant 0 : index
    %36 = vector.load %arg9[%c0_20, %c0_21] : memref<32x128xbf16, #tpu.memory_space<vmem>>, vector<32x128xbf16>
    %cst_22 = arith.constant dense<0.000000e+00> : vector<8x128xf32>
    %37 = tpu.matmul %35, %36, %cst_22 {dimension_numbers = #tpu.dot_dimension_numbers<[1], [0], [0], [1], [0, 0, 1, 1], [], []>} : vector<8x32xbf16>, vector<32x128xbf16>, vector<8x128xf32> -> vector<8x128xf32>
    %38 = arith.addf %34, %37 : vector<8x128xf32>
    %c0_23 = arith.constant 0 : index
    %c0_24 = arith.constant 0 : index
    %39 = vector.load %arg10[%c0_23, %c0_24] : memref<1x128xf32, #tpu.memory_space<vmem>>, vector<1x128xf32>
    %40 = vector.broadcast %39 : vector<1x128xf32> to vector<8x128xf32>
    %41 = arith.addf %38, %40 : vector<8x128xf32>
    %cst_25 = arith.constant 0.000000e+00 : f32
    %42 = vector.broadcast %cst_25 : f32 to vector<8x128xf32>
    %43 = arith.maximumf %41, %42 : vector<8x128xf32>
    %c0_26 = arith.constant 0 : index
    %c0_27 = arith.constant 0 : index
    %44 = vector.load %arg11[%c0_26, %c0_27] : memref<8x128xf32, #tpu.memory_space<vmem>>, vector<8x128xf32>
    tpu.vector_store %arg11[%c0_26, %c0_27], %43 {strides = array<i32>} : memref<8x128xf32, #tpu.memory_space<vmem>>, vector<8x128xf32>,
    return
  }
  func.func @transform_0(%arg0: i32) -> (i32, i32) {
    %c0_i32 = arith.constant 0 : i32
    %c0_i32_0 = arith.constant 0 : i32
    %c0_i32_1 = arith.constant 0 : i32
    return %c0_i32, %c0_i32_0 : i32, i32
  }
  func.func @transform_1(%arg0: i32) -> (i32, i32) {
    %c0_i32 = arith.constant 0 : i32
    %c0_i32_0 = arith.constant 0 : i32
    %c0_i32_1 = arith.constant 0 : i32
    return %c0_i32, %c0_i32_0 : i32, i32
  }
  func.func @transform_2(%arg0: i32) -> (i32, i32) {
    %c0_i32 = arith.constant 0 : i32
    %c0_i32_0 = arith.constant 0 : i32
    %c0_i32_1 = arith.constant 0 : i32
    return %c0_i32, %c0_i32_0 : i32, i32
  }
  func.func @transform_3(%arg0: i32) -> (i32, i32) {
    %c0_i32 = arith.constant 0 : i32
    %c0_i32_0 = arith.constant 0 : i32
    %c0_i32_1 = arith.constant 0 : i32
    return %c0_i32, %c0_i32_0 : i32, i32
  }
  func.func @transform_4(%arg0: i32) -> (i32, i32) {
    %c0_i32 = arith.constant 0 : i32
    %c0_i32_0 = arith.constant 0 : i32
    %c0_i32_1 = arith.constant 0 : i32
    return %c0_i32, %c0_i32_0 : i32, i32
  }
  func.func @transform_5(%arg0: i32) -> (i32, i32) {
    %c0_i32 = arith.constant 0 : i32
    %c0_i32_0 = arith.constant 0 : i32
    %c0_i32_1 = arith.constant 0 : i32
    return %c0_i32, %c0_i32_0 : i32, i32
  }
  func.func @transform_6(%arg0: i32) -> (i32, i32) {
    %c0_i32 = arith.constant 0 : i32
    %c0_i32_0 = arith.constant 0 : i32
    %c0_i32_1 = arith.constant 0 : i32
    return %c0_i32, %c0_i32_0 : i32, i32
  }
  func.func @transform_7(%arg0: i32) -> (i32, i32) {
    %c0_i32 = arith.constant 0 : i32
    %c0_i32_0 = arith.constant 0 : i32
    %c0_i32_1 = arith.constant 0 : i32
    return %c0_i32, %c0_i32_0 : i32, i32
  }
  func.func @transform_8(%arg0: i32) -> (i32, i32) {
    %c0_i32 = arith.constant 0 : i32
    %c0_i32_0 = arith.constant 0 : i32
    %c0_i32_1 = arith.constant 0 : i32
    return %c0_i32, %c0_i32_0 : i32, i32
  }
  func.func @transform_9(%arg0: i32) -> (i32, i32) {
    %c0_i32 = arith.constant 0 : i32
    %c0_i32_0 = arith.constant 0 : i32
    %c0_i32_1 = arith.constant 0 : i32
    return %c0_i32, %c0_i32_0 : i32, i32
  }
  func.func @transform_10(%arg0: i32) -> (i32, i32) {
    %c0_i32 = arith.constant 0 : i32
    %c0_i32_0 = arith.constant 0 : i32
    %c0_i32_1 = arith.constant 0 : i32
    return %c0_i32, %c0_i32_0 : i32, i32
  }
}

</mosaic_0001>

<llo_original>
// kernel: caser_pallas.1
$region0: #{caser_pallas.1}
  #allocation0 [shape = 'u32[]', space=smem, size = 0x4, offset = 0x4, fixed_abs, tag = 'smem constant byte address 0x4 - core index']
  #allocation1 [shape = 'u32[144,128]{1,0:T(1,128)}', space=vmem, size = 0x12000, scoped, tag = 'internal scratch']
  %s0 = inlined_call_operand.hbm [shape: bf16[8,512], index: 0, kind: input, shape index: {}]
  %s1 = inlined_call_operand.hbm [shape: bf16[8,32], index: 1, kind: input, shape index: {}]
  %s2 = inlined_call_operand.hbm [shape: bf16[256,256], index: 2, kind: input, shape index: {}]
  %s3 = inlined_call_operand.vmem [shape: f32[1,256], index: 3, kind: input, shape index: {}]
  %s4 = inlined_call_operand.hbm [shape: f32[64,128], index: 4, kind: input, shape index: {}]
  %s5 = inlined_call_operand.hbm [shape: bf16[256,128], index: 5, kind: input, shape index: {}]
  %s6 = inlined_call_operand.vmem [shape: f32[1,128], index: 6, kind: input, shape index: {}]
  %s7 = inlined_call_operand.hbm [shape: bf16[128,128], index: 7, kind: input, shape index: {}]
  %s8 = inlined_call_operand.vmem [shape: bf16[32,128], index: 8, kind: input, shape index: {}]
  %s9 = inlined_call_operand.vmem [shape: f32[1,128], index: 9, kind: input, shape index: {}]
  %s10 = inlined_call_operand.hbm [shape: f32[8,128], index: 10, kind: output, shape index: {}]
  %s11 = sld [smem:[#allocation0]]
  $region74: #{caser_pallas.1} parent=0
    _
  %s13 = ssub.s32 1, %s11
  %s14 = scalar_select 0, %s13, %s11
  $region1: #{caser_pallas.1} parent=0
    #allocation2 [shape = 'u8[8192]{0}', space=vmem, size = 0x2000, scoped, tag = 'input window, operand 0, single buffered']
    #allocation3 [shape = 's32[1]{0}', space=sflag, size = 0x4, scoped, tag = 'scoped memory for caser_pallas.1']
    #allocation4 [shape = 's32[1]{0}', space=sflag, size = 0x4, scoped, tag = 'scoped memory for caser_pallas.1']
    #allocation5 [shape = 'u8[2048]{0}', space=vmem, size = 0x800, scoped, tag = 'input window, operand 1, single buffered']
    #allocation6 [shape = 's32[1]{0}', space=sflag, size = 0x4, scoped, tag = 'scoped memory for caser_pallas.1']
    #allocation7 [shape = 'u8[131072]{0}', space=vmem, size = 0x20000, scoped, tag = 'input window, operand 2, single buffered']
    #allocation8 [shape = 'u8[32768]{0}', space=vmem, size = 0x8000, scoped, tag = 'input window, operand 4, single buffered']
    #allocation9 [shape = 's32[1]{0}', space=sflag, size = 0x4, scoped, tag = 'scoped memory for caser_pallas.1']
    #allocation10 [shape = 'u8[65536]{0}', space=vmem, size = 0x10000, scoped, tag = 'input window, operand 5, single buffered']
    #allocation11 [shape = 'u8[32768]{0}', space=vmem, size = 0x8000, scoped, tag = 'input window, operand 7, single buffered']
    #allocation12 [shape = 's32[1]{0}', space=sflag, size = 0x4, scoped, tag = 'scoped memory for caser_pallas.1']
    #allocation13 [shape = 'u8[4096]{0}', space=vmem, size = 0x1000, scoped, tag = 'output window, operand 0, single buffered']
    %15 = vsyncpa [#allocation3], 0
    %16 = vsyncpa [#allocation6], 0
    %17 = vsyncpa [#allocation9], 0
    %18 = vsyncpa [#allocation12], 0
    %19 = vsyncpa [#allocation4], 0
    // Predicated region
    $region2: #{caser_pallas.1} parent=1 // pred_check
      _
    $region3: #{caser_pallas.1} parent=1 // pred_check_branch
      %21 = sbr.rel (0) target = $region5
    $region4: #{caser_pallas.1} parent=1 // pred_region
      %s23 = ssub.s32 256, 256
      %24 = vsyncadd [#allocation3], %s23
      %s26 = sshll.u32 [#allocation2], 4
      %s27 = int_to_ptr.vmem [resolvable:$true] %s26
      %29 = dma.hbm_to_vmem [thread:$0]  %s0, 256, %s27, [#allocation3]
    $region5: #{caser_pallas.1} parent=1 // pred_fallthru
      _
    // Predicated region
    $region6: #{caser_pallas.1} parent=1 // pred_check
      _
    $region7: #{caser_pallas.1} parent=1 // pred_check_branch
      %31 = sbr.rel (0) target = $region9
    $region8: #{caser_pallas.1} parent=1 // pred_region
      %s33 = ssub.s32 64, 64
      %34 = vsyncadd [#allocation6], %s33
      %s36 = sshll.u32 [#allocation5], 4
      %s37 = int_to_ptr.vmem [resolvable:$true] %s36
      %39 = dma.hbm_to_vmem [thread:$0]  %s1, 64, %s37, [#allocation6]
    $region9: #{caser_pallas.1} parent=1 // pred_fallthru
      _
    // Predicated region
    $region10: #{caser_pallas.1} parent=1 // pred_check
      _
    $region11: #{caser_pallas.1} parent=1 // pred_check_branch
      %41 = sbr.rel (0) target = $region13
    $region12: #{caser_pallas.1} parent=1 // pred_region
      %s43 = ssub.s32 4096, 4096
      %44 = vsyncadd [#allocation6], %s43
      %s45 = sshll.u32 [#allocation7], 4
      %s46 = int_to_ptr.vmem [resolvable:$true] %s45
      %51 = dma.hbm_to_vmem [thread:$0]  %s2, 4096, %s46, [#allocation6], 128, 128, 8
    $region13: #{caser_pallas.1} parent=1 // pred_fallthru
      _
    // Predicated region
    $region14: #{caser_pallas.1} parent=1 // pred_check
      _
    $region15: #{caser_pallas.1} parent=1 // pred_check_branch
      %53 = sbr.rel (0) target = $region17
    $region16: #{caser_pallas.1} parent=1 // pred_region
      _
    $region17: #{caser_pallas.1} parent=1 // pred_fallthru
      _
    // Predicated region
    $region18: #{caser_pallas.1} parent=1 // pred_check
      _
    $region19: #{caser_pallas.1} parent=1 // pred_check_branch
      %55 = sbr.rel (0) target = $region21
    $region20: #{caser_pallas.1} parent=1 // pred_region
      %s57 = ssub.s32 1024, 1024
      %58 = vsyncadd [#allocation9], %s57
      %s59 = sshll.u32 [#allocation8], 4
      %s60 = int_to_ptr.vmem [resolvable:$true] %s59
      %65 = dma.hbm_to_vmem [thread:$0]  %s4, 1024, %s60, [#allocation9], 128, 128, 8
    $region21: #{caser_pallas.1} parent=1 // pred_fallthru
      _
    // Predicated region
    $region22: #{caser_pallas.1} parent=1 // pred_check
      _
    $region23: #{caser_pallas.1} parent=1 // pred_check_branch
      %67 = sbr.rel (0) target = $region25
    $region24: #{caser_pallas.1} parent=1 // pred_region
      %s69 = ssub.s32 2048, 2048
      %70 = vsyncadd [#allocation9], %s69
      %s71 = sshll.u32 [#allocation10], 4
      %s72 = int_to_ptr.vmem [resolvable:$true] %s71
      %77 = dma.hbm_to_vmem [thread:$0]  %s5, 2048, %s72, [#allocation9], 64, 64, 4
    $region25: #{caser_pallas.1} parent=1 // pred_fallthru
      _
    // Predicated region
    $region26: #{caser_pallas.1} parent=1 // pred_check
      _
    $region27: #{caser_pallas.1} parent=1 // pred_check_branch
      %79 = sbr.rel (0) target = $region29
    $region28: #{caser_pallas.1} parent=1 // pred_region
      _
    $region29: #{caser_pallas.1} parent=1 // pred_fallthru
      _
    // Predicated region
    $region30: #{caser_pallas.1} parent=1 // pred_check
      _
    $region31: #{caser_pallas.1} parent=1 // pred_check_branch
      %81 = sbr.rel (0) target = $region33
    $region32: #{caser_pallas.1} parent=1 // pred_region
      %s83 = ssub.s32 1024, 1024
      %84 = vsyncadd [#allocation12], %s83
      %s85 = sshll.u32 [#allocation11], 4
      %s86 = int_to_ptr.vmem [resolvable:$true] %s85
      %91 = dma.hbm_to_vmem [thread:$0]  %s7, 1024, %s86, [#allocation12], 64, 64, 4
    $region33: #{caser_pallas.1} parent=1 // pred_fallthru
      _
    // Predicated region
    $region34: #{caser_pallas.1} parent=1 // pred_check
      _
    $region35: #{caser_pallas.1} parent=1 // pred_check_branch
      %93 = sbr.rel (0) target = $region37
    $region36: #{caser_pallas.1} parent=1 // pred_region
      _
    $region37: #{caser_pallas.1} parent=1 // pred_fallthru
      _
    // Predicated region
    $region38: #{caser_pallas.1} parent=1 // pred_check
      _
    $region39: #{caser_pallas.1} parent=1 // pred_check_branch
      %95 = sbr.rel (0) target = $region41
    $region40: #{caser_pallas.1} parent=1 // pred_region
      _
    $region41: #{caser_pallas.1} parent=1 // pred_fallthru
      _
    // Predicated region
    $region42: #{caser_pallas.1} parent=1 // pred_check
      _
    $region43: #{caser_pallas.1} parent=1 // pred_check_branch
      %97 = sbr.rel (0) target = $region45
    $region44: #{caser_pallas.1} parent=1 // pred_region
      %98 = dma.done [#allocation3], 256
    $region45: #{caser_pallas.1} parent=1 // pred_fallthru
      _
    // Predicated region
    $region46: #{caser_pallas.1} parent=1 // pred_check
      _
    $region47: #{caser_pallas.1} parent=1 // pred_check_branch
      %100 = sbr.rel (0) target = $region49
    $region48: #{caser_pallas.1} parent=1 // pred_region
      %101 = dma.done [#allocation6], 64
    $region49: #{caser_pallas.1} parent=1 // pred_fallthru
      _
    // Predicated region
    $region50: #{caser_pallas.1} parent=1 // pred_check
      _
    $region51: #{caser_pallas.1} parent=1 // pred_check_branch
      %103 = sbr.rel (0) target = $region53
    $region52: #{caser_pallas.1} parent=1 // pred_region
      %104 = dma.done [#allocation6], 4096
    $region53: #{caser_pallas.1} parent=1 // pred_fallthru
      _
    // Predicated region
    $region54: #{caser_pallas.1} parent=1 // pred_check
      _
    $region55: #{caser_pallas.1} parent=1 // pred_check_branch
      %106 = sbr.rel (0) target = $region57
    $region56: #{caser_pallas.1} parent=1 // pred_region
      %107 = dma.done [#allocation9], 1024
    $region57: #{caser_pallas.1} parent=1 // pred_fallthru
      _
    // Predicated region
    $region58: #{caser_pallas.1} parent=1 // pred_check
      _
    $region59: #{caser_pallas.1} parent=1 // pred_check_branch
      %109 = sbr.rel (0) target = $region61
    $region60: #{caser_pallas.1} parent=1 // pred_region
      %110 = dma.done [#allocation9], 2048
    $region61: #{caser_pallas.1} parent=1 // pred_fallthru
      _
    // Predicated region
    $region62: #{caser_pallas.1} parent=1 // pred_check
      _
    $region63: #{caser_pallas.1} parent=1 // pred_check_branch
      %112 = sbr.rel (0) target = $region65
    $region64: #{caser_pallas.1} parent=1 // pred_region
      %113 = dma.done [#allocation12], 1024
    $region65: #{caser_pallas.1} parent=1 // pred_fallthru
      _
    %v115 = vld [vmem:[#allocation2] sm:$0xff]
    %v116 = vld [vmem:[#allocation2 + $0x8] sm:$0xff]
    %v118 = vunpack.c.l.b16 %v115
    %v119 = vunpack.c.h.b16 %v115
    %v120 = vpack.c.b16 %v118, %v118
    %v121 = vpack.c.b16 %v119, %v119
    %v123 = vunpack.c.l.b16 %v116
    %v124 = vpack.c.b16 %v123, %v123
    %125 = vrot.lane.b32.xlu0 %v120, 96
    %v126 = vpop.permute.xlu0 %125
    %127 = vrot.lane.b32.xlu0 %v121, 96
    %v128 = vpop.permute.xlu0 %127
    %129 = vrot.lane.b32.xlu0 %v124, 96
    %v130 = vpop.permute.xlu0 %129
    %vm131 = vcmask 785408
    %v132 = vsel %vm131, %v126, %v128
    %v133 = vsel %vm131, %v128, %v130
    %134 = vrot.lane.b32.xlu0 %v120, 64
    %v135 = vpop.permute.xlu0 %134
    %136 = vrot.lane.b32.xlu0 %v121, 64
    %v137 = vpop.permute.xlu0 %136
    %138 = vrot.lane.b32.xlu0 %v124, 64
    %v139 = vpop.permute.xlu0 %138
    %vm140 = vcmask 523264
    %v141 = vsel %vm140, %v135, %v137
    %v142 = vsel %vm140, %v137, %v139
    %143 = vrot.lane.b32.xlu0 %v120, 32
    %v144 = vpop.permute.xlu0 %143
    %145 = vrot.lane.b32.xlu0 %v121, 32
    %v146 = vpop.permute.xlu0 %145
    %147 = vrot.lane.b32.xlu0 %v124, 32
    %v148 = vpop.permute.xlu0 %147
    %vm149 = vcmask 261120
    %v150 = vsel %vm149, %v144, %v146
    %v151 = vsel %vm149, %v146, %v148
    %v152 = vunpack.c.h.b16 %v116
    %v153 = vpack.c.b16 %v152, %v152
    %154 = vrot.lane.b32.xlu0 %v153, 96
    %v155 = vpop.permute.xlu0 %154
    %v156 = vsel %vm131, %v130, %v155
    %157 = vrot.lane.b32.xlu0 %v153, 64
    %v158 = vpop.permute.xlu0 %157
    %v159 = vsel %vm140, %v139, %v158
    %160 = vrot.lane.b32.xlu0 %v153, 32
    %v161 = vpop.permute.xlu0 %160
    %v162 = vsel %vm149, %v148, %v161
    %vm163 = vcmask 1043456
    %v166 = vsel %vm163, %v120, %v132
    %v170 = vsel %vm163, %v121, %v133
    %v174 = vsel %vm163, %v141, %v150
    %v178 = vsel %vm163, %v142, %v151
    %v182 = vsel %vm163, %v124, %v156
    %v186 = vsel %vm163, %v159, %v162
    %v188 = vld [vmem:[#allocation7] sm:$0xff]
    %v189 = vld [vmem:[#allocation7 + $0x8] sm:$0xff]
    %v190 = vld [vmem:[#allocation7 + $0x10] sm:$0xff]
    %v191 = vld [vmem:[#allocation7 + $0x18] sm:$0xff]
    %v192 = vld [vmem:[#allocation7 + $0x20] sm:$0xff]
    %v193 = vld [vmem:[#allocation7 + $0x28] sm:$0xff]
    %v194 = vld [vmem:[#allocation7 + $0x30] sm:$0xff]
    %v195 = vld [vmem:[#allocation7 + $0x38] sm:$0xff]
    %v196 = vld [vmem:[#allocation7 + $0x40] sm:$0xff]
    %v197 = vld [vmem:[#allocation7 + $0x48] sm:$0xff]
    %v198 = vld [vmem:[#allocation7 + $0x50] sm:$0xff]
    %v199 = vld [vmem:[#allocation7 + $0x58] sm:$0xff]
    %v200 = vld [vmem:[#allocation7 + $0x60] sm:$0xff]
    %v201 = vld [vmem:[#allocation7 + $0x68] sm:$0xff]
    %v202 = vld [vmem:[#allocation7 + $0x70] sm:$0xff]
    %v203 = vld [vmem:[#allocation7 + $0x78] sm:$0xff]
    %v204 = vld [vmem:[#allocation7 + $0x80] sm:$0xff]
    %v205 = vld [vmem:[#allocation7 + $0x88] sm:$0xff]
    %v206 = vld [vmem:[#allocation7 + $0x90] sm:$0xff]
    %v207 = vld [vmem:[#allocation7 + $0x98] sm:$0xff]
    %v208 = vld [vmem:[#allocation7 + $0xa0] sm:$0xff]
    %v209 = vld [vmem:[#allocation7 + $0xa8] sm:$0xff]
    %v210 = vld [vmem:[#allocation7 + $0xb0] sm:$0xff]
    %v211 = vld [vmem:[#allocation7 + $0xb8] sm:$0xff]
    %v212 = vld [vmem:[#allocation7 + $0xc0] sm:$0xff]
    %v213 = vld [vmem:[#allocation7 + $0xc8] sm:$0xff]
    %v214 = vld [vmem:[#allocation7 + $0xd0] sm:$0xff]
    %v215 = vld [vmem:[#allocation7 + $0xd8] sm:$0xff]
    %v216 = vld [vmem:[#allocation7 + $0xe0] sm:$0xff]
    %v217 = vld [vmem:[#allocation7 + $0xe8] sm:$0xff]
    %v218 = vld [vmem:[#allocation7 + $0xf0] sm:$0xff]
    %v219 = vld [vmem:[#allocation7 + $0xf8] sm:$0xff]
    %v220 = vld [vmem:[%s3] sm:$0x3]
    %v222 = vlaneseq
    %v223 = vshrl.u32 %v222, 7
    %v224 = vsub.s32 0, %v223
    %v225 = vrot.slane %v220, %v224
    %v226 = vlaneseq
    %v227 = vshrl.u32 %v226, 7
    %v228 = vsub.s32 1, %v227
    %v229 = vrot.slane %v220, %v228
    %v264 = vunpack.c.l.b16 %v188
    %v265 = vunpack.c.h.b16 %v188
    %v266 = vunpack.c.l.b16 %v189
    %v267 = vunpack.c.h.b16 %v189
    %v268 = vunpack.c.l.b16 %v190
    %v269 = vunpack.c.h.b16 %v190
    %v270 = vunpack.c.l.b16 %v191
    %v271 = vunpack.c.h.b16 %v191
    %v272 = vunpack.c.l.b16 %v192
    %v273 = vunpack.c.h.b16 %v192
    %v274 = vunpack.c.l.b16 %v193
    %v275 = vunpack.c.h.b16 %v193
    %v276 = vunpack.c.l.b16 %v194
    %v277 = vunpack.c.h.b16 %v194
    %v278 = vunpack.c.l.b16 %v195
    %v279 = vunpack.c.h.b16 %v195
    %v280 = vunpack.c.l.b16 %v196
    %v281 = vunpack.c.h.b16 %v196
    %v282 = vunpack.c.l.b16 %v197
    %v283 = vunpack.c.h.b16 %v197
    %v284 = vunpack.c.l.b16 %v198
    %v285 = vunpack.c.h.b16 %v198
    %v286 = vunpack.c.l.b16 %v199
    %v287 = vunpack.c.h.b16 %v199
    %v288 = vunpack.c.l.b16 %v200
    %v289 = vunpack.c.h.b16 %v200
    %v290 = vunpack.c.l.b16 %v201
    %v291 = vunpack.c.h.b16 %v201
    %v292 = vunpack.c.l.b16 %v202
    %v293 = vunpack.c.h.b16 %v202
    %v294 = vunpack.c.l.b16 %v203
    %v295 = vunpack.c.h.b16 %v203
    %v296 = vunpack.c.l.b16 %v204
    %v297 = vunpack.c.h.b16 %v204
    %v298 = vunpack.c.l.b16 %v205
    %v299 = vunpack.c.h.b16 %v205
    %v300 = vunpack.c.l.b16 %v206
    %v301 = vunpack.c.h.b16 %v206
    %v302 = vunpack.c.l.b16 %v207
    %v303 = vunpack.c.h.b16 %v207
    %v304 = vunpack.c.l.b16 %v208
    %v305 = vunpack.c.h.b16 %v208
    %v306 = vunpack.c.l.b16 %v209
    %v307 = vunpack.c.h.b16 %v209
    %v308 = vunpack.c.l.b16 %v210
    %v309 = vunpack.c.h.b16 %v210
    %v310 = vunpack.c.l.b16 %v211
    %v311 = vunpack.c.h.b16 %v211
    %v312 = vunpack.c.l.b16 %v212
    %v313 = vunpack.c.h.b16 %v212
    %v314 = vunpack.c.l.b16 %v213
    %v315 = vunpack.c.h.b16 %v213
    %v316 = vunpack.c.l.b16 %v214
    %v317 = vunpack.c.h.b16 %v214
    %v318 = vunpack.c.l.b16 %v215
    %v319 = vunpack.c.h.b16 %v215
    %v320 = vunpack.c.l.b16 %v216
    %v321 = vunpack.c.h.b16 %v216
    %v322 = vunpack.c.l.b16 %v217
    %v323 = vunpack.c.h.b16 %v217
    %v324 = vunpack.c.l.b16 %v218
    %v325 = vunpack.c.h.b16 %v218
    %v326 = vunpack.c.l.b16 %v219
    %v327 = vunpack.c.h.b16 %v219
    %v328 = vpack.c.b16 %v266, %v264
    %v329 = vpack.c.b16 %v267, %v265
    %v330 = vpack.c.b16 %v270, %v268
    %v331 = vpack.c.b16 %v271, %v269
    %v332 = vpack.c.b16 %v274, %v272
    %v333 = vpack.c.b16 %v275, %v273
    %v334 = vpack.c.b16 %v278, %v276
    %v335 = vpack.c.b16 %v279, %v277
    %v336 = vpack.c.b16 %v282, %v280
    %v337 = vpack.c.b16 %v283, %v281
    %v338 = vpack.c.b16 %v286, %v284
    %v339 = vpack.c.b16 %v287, %v285
    %v340 = vpack.c.b16 %v290, %v288
    %v341 = vpack.c.b16 %v291, %v289
    %v342 = vpack.c.b16 %v294, %v292
    %v343 = vpack.c.b16 %v295, %v293
    %v344 = vpack.c.b16 %v298, %v296
    %v345 = vpack.c.b16 %v299, %v297
    %v346 = vpack.c.b16 %v302, %v300
    %v347 = vpack.c.b16 %v303, %v301
    %v348 = vpack.c.b16 %v306, %v304
    %v349 = vpack.c.b16 %v307, %v305
    %v350 = vpack.c.b16 %v310, %v308
    %v351 = vpack.c.b16 %v311, %v309
    %v352 = vpack.c.b16 %v314, %v312
    %v353 = vpack.c.b16 %v315, %v313
    %v354 = vpack.c.b16 %v318, %v316
    %v355 = vpack.c.b16 %v319, %v317
    %v356 = vpack.c.b16 %v322, %v320
    %v357 = vpack.c.b16 %v323, %v321
    %v358 = vpack.c.b16 %v326, %v324
    %v359 = vpack.c.b16 %v327, %v325
    %392 = vmatprep.subr.bf16.mxu0 %v329
    %393 = vmatpush1.bf16.msra.mxu0 %v328
    %394 = vmatprep.subr.bf16.mxu0 %v331
    %395 = vmatpush1.bf16.msra.mxu0 %v330
    %396 = vmatprep.subr.bf16.mxu0 %v333
    %397 = vmatpush1.bf16.msra.mxu0 %v332
    %398 = vmatprep.subr.bf16.mxu0 %v335
    %399 = vmatpush1.bf16.msra.mxu0 %v334
    %400 = vmatprep.subr.bf16.mxu0 %v337
    %401 = vmatpush1.bf16.msra.mxu0 %v336
    %402 = vmatprep.subr.bf16.mxu0 %v339
    %403 = vmatpush1.bf16.msra.mxu0 %v338
    %404 = vmatprep.subr.bf16.mxu0 %v341
    %405 = vmatpush1.bf16.msra.mxu0 %v340
    %406 = vmatprep.subr.bf16.mxu0 %v343
    %407 = vmatpush1.bf16.msra.mxu0 %v342
    %408 = vmatprep.subr.bf16.mxu0 %v345
    %409 = vmatpush1.bf16.msra.mxu0 %v344
    %410 = vmatprep.subr.bf16.mxu0 %v347
    %411 = vmatpush1.bf16.msra.mxu0 %v346
    %412 = vmatprep.subr.bf16.mxu0 %v349
    %413 = vmatpush1.bf16.msra.mxu0 %v348
    %414 = vmatprep.subr.bf16.mxu0 %v351
    %415 = vmatpush1.bf16.msra.mxu0 %v350
    %416 = vmatprep.subr.bf16.mxu0 %v353
    %417 = vmatpush1.bf16.msra.mxu0 %v352
    %418 = vmatprep.subr.bf16.mxu0 %v355
    %419 = vmatpush1.bf16.msra.mxu0 %v354
    %420 = vmatprep.subr.bf16.mxu0 %v357
    %421 = vmatpush1.bf16.msra.mxu0 %v356
    %422 = vmatprep.subr.bf16.mxu0 %v359
    %423 = vmatpush1.bf16.msra.mxu0 %v358
    %424 = vmatprep.mubr.bf16.mxu0 %v170
    %425 = vmatmul.mubr.bf16.gmra.mrb[0].mxu0 %v166
    %v426 = vpop.f32.mrb[0].mxu0
    %v427 = vadd.f32 %v225, %v426
    %v428 = vpop.f32.mrb[0].mxu0
    %v429 = vadd.f32 %v229, %v428
    %v430 = vpop.f32.mrb[0].mxu0
    %v431 = vadd.f32 %v225, %v430
    %v432 = vpop.f32.mrb[0].mxu0
    %433 = vmatprep.mubr.bf16.mxu0 %v178
    %434 = vmatmul.mubr.bf16.gmra.mrb[0].mxu0 %v174
    %v435 = vpop.f32.mrb[0].mxu0
    %v436 = vadd.f32 %v225, %v435
    %v437 = vpop.f32.mrb[0].mxu0
    %v438 = vpop.f32.mrb[0].mxu0
    %v439 = vadd.f32 %v225, %v438
    %v440 = vpop.f32.mrb[0].mxu0
    %441 = vmatprep.mubr.bf16.mxu0 %v182
    %442 = vmatmul.mubr.bf16.gmra.mrb[0].mxu0 %v170
    %v443 = vpop.f32.mrb[0].mxu0
    %v444 = vadd.f32 %v225, %v443
    %v445 = vpop.f32.mrb[0].mxu0
    %v446 = vpop.f32.mrb[0].mxu0
    %v447 = vadd.f32 %v225, %v446
    %v448 = vpop.f32.mrb[0].mxu0
    %449 = vmatprep.mubr.bf16.mxu0 %v186
    %450 = vmatmul.mubr.bf16.gmra.mrb[0].mxu0 %v178
    %v451 = vpop.f32.mrb[0].mxu0
    %v452 = vadd.f32 %v225, %v451
    %v453 = vpop.f32.mrb[0].mxu0
    %v454 = vpop.f32.mrb[0].mxu0
    %v455 = vadd.f32 %v225, %v454
    %v456 = vpop.f32.mrb[0].mxu0
    %457 = vdwg.mxu0
    %v458 = vld [vmem:[#allocation8] sm:$0xff]
    %v459 = vld [vmem:[#allocation8 + $0x8] sm:$0xff]
    %v460 = vld [vmem:[#allocation8 + $0x10] sm:$0xff]
    %v461 = vld [vmem:[#allocation8 + $0x18] sm:$0xff]
    %v462 = vld [vmem:[#allocation8 + $0x20] sm:$0xff]
    %v463 = vld [vmem:[#allocation8 + $0x28] sm:$0xff]
    %v464 = vld [vmem:[#allocation8 + $0x30] sm:$0xff]
    %v465 = vld [vmem:[#allocation8 + $0x38] sm:$0xff]
    %v466 = vadd.f32 %v427, %v458
    %v467 = vadd.f32 %v431, %v459
    %v468 = vadd.f32 %v436, %v460
    %v469 = vadd.f32 %v439, %v461
    %v470 = vadd.f32 %v444, %v462
    %v471 = vadd.f32 %v447, %v463
    %v472 = vadd.f32 %v452, %v464
    %v473 = vadd.f32 %v455, %v465
    %v474 = vmax.f32 %v466, 0.0
    %v475 = vmax.f32 %v467, 0.0
    %v476 = vmax.f32 %v468, 0.0
    %v477 = vmax.f32 %v469, 0.0
    %v478 = vmax.f32 %v470, 0.0
    %v479 = vmax.f32 %v471, 0.0
    %v480 = vmax.f32 %v472, 0.0
    %v481 = vmax.f32 %v473, 0.0
    %v482 = vmax.f32 %v474, %v478
    %v483 = vmax.f32 %v475, %v479
    %v484 = vmax.f32 %v476, %v480
    %v485 = vmax.f32 %v477, %v481
    %v486 = vmax.f32 %v482, %v483
    %v487 = vmax.f32 %v484, %v485
    %v488 = vmax.f32 %v486, %v487
    %v489 = vpack.c.bf16 %v429, %v429
    %v490 = vpack.c.bf16 %v488, %v488
    %v491 = vld [vmem:[#allocation10] sm:$0xf]
    %v492 = vld [vmem:[#allocation10 + $0x4] sm:$0xf]
    %v493 = vld [vmem:[#allocation10 + $0x8] sm:$0xf]
    %v494 = vld [vmem:[#allocation10 + $0xc] sm:$0xf]
    %v495 = vld [vmem:[#allocation10 + $0x10] sm:$0xf]
    %v496 = vld [vmem:[#allocation10 + $0x14] sm:$0xf]
    %v497 = vld [vmem:[#allocation10 + $0x18] sm:$0xf]
    %v498 = vld [vmem:[#allocation10 + $0x1c] sm:$0xf]
    %v499 = vld [vmem:[#allocation10 + $0x20] sm:$0xf]
    %v500 = vld [vmem:[#allocation10 + $0x24] sm:$0xf]
    %v501 = vld [vmem:[#allocation10 + $0x28] sm:$0xf]
    %v502 = vld [vmem:[#allocation10 + $0x2c] sm:$0xf]
    %v503 = vld [vmem:[#allocation10 + $0x30] sm:$0xf]
    %v504 = vld [vmem:[#allocation10 + $0x34] sm:$0xf]
    %v505 = vld [vmem:[#allocation10 + $0x38] sm:$0xf]
    %v506 = vld [vmem:[#allocation10 + $0x3c] sm:$0xf]
    %v507 = vld [vmem:[#allocation10 + $0x40] sm:$0xf]
    %v508 = vld [vmem:[#allocation10 + $0x44] sm:$0xf]
    %v509 = vld [vmem:[#allocation10 + $0x48] sm:$0xf]
    %v510 = vld [vmem:[#allocation10 + $0x4c] sm:$0xf]
    %v511 = vld [vmem:[#allocation10 + $0x50] sm:$0xf]
    %v512 = vld [vmem:[#allocation10 + $0x54] sm:$0xf]
    %v513 = vld [vmem:[#allocation10 + $0x58] sm:$0xf]
    %v514 = vld [vmem:[#allocation10 + $0x5c] sm:$0xf]
    %v515 = vld [vmem:[#allocation10 + $0x60] sm:$0xf]
    %v516 = vld [vmem:[#allocation10 + $0x64] sm:$0xf]
    %v517 = vld [vmem:[#allocation10 + $0x68] sm:$0xf]
    %v518 = vld [vmem:[#allocation10 + $0x6c] sm:$0xf]
    %v519 = vld [vmem:[#allocation10 + $0x70] sm:$0xf]
    %v520 = vld [vmem:[#allocation10 + $0x74] sm:$0xf]
    %v521 = vld [vmem:[#allocation10 + $0x78] sm:$0xf]
    %v522 = vld [vmem:[#allocation10 + $0x7c] sm:$0xf]
    %v523 = vld [vmem:[%s6] sm:$0x1]
    %v525 = vlaneseq
    %v526 = vshrl.u32 %v525, 7
    %v527 = vsub.s32 0, %v526
    %v528 = vrot.slane %v523, %v527
    %v562 = vunpack.c.l.b16 %v491
    %v563 = vunpack.c.l.b16 %v492
    %v564 = vunpack.c.l.b16 %v493
    %v565 = vunpack.c.l.b16 %v494
    %v566 = vunpack.c.l.b16 %v495
    %v567 = vunpack.c.l.b16 %v496
    %v568 = vunpack.c.l.b16 %v497
    %v569 = vunpack.c.l.b16 %v498
    %v570 = vunpack.c.l.b16 %v499
    %v571 = vunpack.c.l.b16 %v500
    %v572 = vunpack.c.l.b16 %v501
    %v573 = vunpack.c.l.b16 %v502
    %v574 = vunpack.c.l.b16 %v503
    %v575 = vunpack.c.l.b16 %v504
    %v576 = vunpack.c.l.b16 %v505
    %v577 = vunpack.c.l.b16 %v506
    %v578 = vunpack.c.l.b16 %v507
    %v579 = vunpack.c.l.b16 %v508
    %v580 = vunpack.c.l.b16 %v509
    %v581 = vunpack.c.l.b16 %v510
    %v582 = vunpack.c.l.b16 %v511
    %v583 = vunpack.c.l.b16 %v512
    %v584 = vunpack.c.l.b16 %v513
    %v585 = vunpack.c.l.b16 %v514
    %v586 = vunpack.c.l.b16 %v515
    %v587 = vunpack.c.l.b16 %v516
    %v588 = vunpack.c.l.b16 %v517
    %v589 = vunpack.c.l.b16 %v518
    %v590 = vunpack.c.l.b16 %v519
    %v591 = vunpack.c.l.b16 %v520
    %v592 = vunpack.c.l.b16 %v521
    %v593 = vunpack.c.l.b16 %v522
    %v594 = vpack.c.b16 %v563, %v562
    %v595 = vpack.c.b16 %v565, %v564
    %v596 = vpack.c.b16 %v567, %v566
    %v597 = vpack.c.b16 %v569, %v568
    %v598 = vpack.c.b16 %v571, %v570
    %v599 = vpack.c.b16 %v573, %v572
    %v600 = vpack.c.b16 %v575, %v574
    %v601 = vpack.c.b16 %v577, %v576
    %v602 = vpack.c.b16 %v579, %v578
    %v603 = vpack.c.b16 %v581, %v580
    %v604 = vpack.c.b16 %v583, %v582
    %v605 = vpack.c.b16 %v585, %v584
    %v606 = vpack.c.b16 %v587, %v586
    %v607 = vpack.c.b16 %v589, %v588
    %v608 = vpack.c.b16 %v591, %v590
    %v609 = vpack.c.b16 %v593, %v592
    %626 = vmatprep.subr.bf16.mxu0 0
    %627 = vmatpush1.bf16.msra.mxu0 %v594
    %628 = vmatprep.subr.bf16.mxu0 0
    %629 = vmatpush1.bf16.msra.mxu0 %v595
    %630 = vmatprep.subr.bf16.mxu0 0
    %631 = vmatpush1.bf16.msra.mxu0 %v596
    %632 = vmatprep.subr.bf16.mxu0 0
    %633 = vmatpush1.bf16.msra.mxu0 %v597
    %634 = vmatprep.subr.bf16.mxu0 0
    %635 = vmatpush1.bf16.msra.mxu0 %v598
    %636 = vmatprep.subr.bf16.mxu0 0
    %637 = vmatpush1.bf16.msra.mxu0 %v599
    %638 = vmatprep.subr.bf16.mxu0 0
    %639 = vmatpush1.bf16.msra.mxu0 %v600
    %640 = vmatprep.subr.bf16.mxu0 0
    %641 = vmatpush1.bf16.msra.mxu0 %v601
    %642 = vmatprep.subr.bf16.mxu0 0
    %643 = vmatpush1.bf16.msra.mxu0 %v602
    %644 = vmatprep.subr.bf16.mxu0 0
    %645 = vmatpush1.bf16.msra.mxu0 %v603
    %646 = vmatprep.subr.bf16.mxu0 0
    %647 = vmatpush1.bf16.msra.mxu0 %v604
    %648 = vmatprep.subr.bf16.mxu0 0
    %649 = vmatpush1.bf16.msra.mxu0 %v605
    %650 = vmatprep.subr.bf16.mxu0 0
    %651 = vmatpush1.bf16.msra.mxu0 %v606
    %652 = vmatprep.subr.bf16.mxu0 0
    %653 = vmatpush1.bf16.msra.mxu0 %v607
    %654 = vmatprep.subr.bf16.mxu0 0
    %655 = vmatpush1.bf16.msra.mxu0 %v608
    %656 = vmatprep.subr.bf16.mxu0 0
    %657 = vmatpush1.bf16.msra.mxu0 %v609
    %658 = vmatprep.mubr.bf16.mxu0 %v490
    %659 = vmatmul.mubr.bf16.gmra.mrb[0].mxu0 %v489
    %v660 = vpop.f32.mrb[0].mxu0
    %v661 = vadd.f32 %v528, %v660
    %v662 = vpop.f32.mrb[0].mxu0
    %v663 = vpop.f32.mrb[0].mxu0
    %v664 = vpop.f32.mrb[0].mxu0
    %665 = vdwg.mxu0
    %v666 = vmax.f32 %v661, 0.0
    %v667 = vpack.c.bf16 %v666, %v666
    %v668 = vld [vmem:[#allocation11] sm:$0xf]
    %v669 = vld [vmem:[#allocation11 + $0x4] sm:$0xf]
    %v670 = vld [vmem:[#allocation11 + $0x8] sm:$0xf]
    %v671 = vld [vmem:[#allocation11 + $0xc] sm:$0xf]
    %v672 = vld [vmem:[#allocation11 + $0x10] sm:$0xf]
    %v673 = vld [vmem:[#allocation11 + $0x14] sm:$0xf]
    %v674 = vld [vmem:[#allocation11 + $0x18] sm:$0xf]
    %v675 = vld [vmem:[#allocation11 + $0x1c] sm:$0xf]
    %v676 = vld [vmem:[#allocation11 + $0x20] sm:$0xf]
    %v677 = vld [vmem:[#allocation11 + $0x24] sm:$0xf]
    %v678 = vld [vmem:[#allocation11 + $0x28] sm:$0xf]
    %v679 = vld [vmem:[#allocation11 + $0x2c] sm:$0xf]
    %v680 = vld [vmem:[#allocation11 + $0x30] sm:$0xf]
    %v681 = vld [vmem:[#allocation11 + $0x34] sm:$0xf]
    %v682 = vld [vmem:[#allocation11 + $0x38] sm:$0xf]
    %v683 = vld [vmem:[#allocation11 + $0x3c] sm:$0xf]
    %v684 = vld [vmem:[#allocation5] sm:$0xf]
    %v685 = vld [vmem:[%s8] sm:$0xf]
    %v686 = vld [vmem:[%s8 + $0x4] sm:$0xf]
    %v687 = vld [vmem:[%s8 + $0x8] sm:$0xf]
    %v688 = vld [vmem:[%s8 + $0xc] sm:$0xf]
    %v693 = vunpack.c.l.b16 %v685
    %v694 = vunpack.c.l.b16 %v686
    %v695 = vunpack.c.l.b16 %v687
    %v696 = vunpack.c.l.b16 %v688
    %v697 = vpack.c.b16 %v694, %v693
    %v698 = vpack.c.b16 %v696, %v695
    %vm701 = vcmask 261120
    %v703 = vsel %vm701, %v684, 0
    %705 = vmatprep.subr.bf16.mxu0 0
    %706 = vmatpush1.bf16.msra.mxu0 %v697
    %707 = vmatprep.subr.bf16.mxu0 0
    %708 = vmatpush1.bf16.msra.mxu0 %v698
    %709 = vmatprep.subr.bf16.mxu0 0
    %710 = vmatpush1.bf16.msra.mxu0 0
    %711 = vmatprep.subr.bf16.mxu0 0
    %712 = vmatpush1.bf16.msra.mxu0 0
    %713 = vmatprep.subr.bf16.mxu0 0
    %714 = vmatpush1.bf16.msra.mxu0 0
    %715 = vmatprep.subr.bf16.mxu0 0
    %716 = vmatpush1.bf16.msra.mxu0 0
    %717 = vmatprep.subr.bf16.mxu0 0
    %718 = vmatpush1.bf16.msra.mxu0 0
    %719 = vmatprep.subr.bf16.mxu0 0
    %720 = vmatpush1.bf16.msra.mxu0 0
    %721 = vmatprep.subr.bf16.mxu0 0
    %722 = vmatpush1.bf16.msra.mxu0 0
    %723 = vmatprep.subr.bf16.mxu0 0
    %724 = vmatpush1.bf16.msra.mxu0 0
    %725 = vmatprep.subr.bf16.mxu0 0
    %726 = vmatpush1.bf16.msra.mxu0 0
    %727 = vmatprep.subr.bf16.mxu0 0
    %728 = vmatpush1.bf16.msra.mxu0 0
    %729 = vmatprep.subr.bf16.mxu0 0
    %730 = vmatpush1.bf16.msra.mxu0 0
    %731 = vmatprep.subr.bf16.mxu0 0
    %732 = vmatpush1.bf16.msra.mxu0 0
    %733 = vmatprep.subr.bf16.mxu0 0
    %734 = vmatpush1.bf16.msra.mxu0 0
    %735 = vmatprep.subr.bf16.mxu0 0
    %736 = vmatpush1.bf16.msra.mxu0 0
    %737 = vmatprep.mubr.bf16.mxu0 0
    %738 = vmatmul.mubr.bf16.gmra.mrb[0].mxu0 %v703
    %v739 = vpop.f32.mrb[0].mxu0
    %v740 = vadd.f32 0.0, %v739
    %v741 = vpop.f32.mrb[0].mxu0
    %v742 = vpop.f32.mrb[0].mxu0
    %v743 = vpop.f32.mrb[0].mxu0
    %744 = vdwg.mxu0
    %v761 = vunpack.c.l.b16 %v668
    %v762 = vunpack.c.l.b16 %v669
    %v763 = vunpack.c.l.b16 %v670
    %v764 = vunpack.c.l.b16 %v671
    %v765 = vunpack.c.l.b16 %v672
    %v766 = vunpack.c.l.b16 %v673
    %v767 = vunpack.c.l.b16 %v674
    %v768 = vunpack.c.l.b16 %v675
    %v769 = vunpack.c.l.b16 %v676
    %v770 = vunpack.c.l.b16 %v677
    %v771 = vunpack.c.l.b16 %v678
    %v772 = vunpack.c.l.b16 %v679
    %v773 = vunpack.c.l.b16 %v680
    %v774 = vunpack.c.l.b16 %v681
    %v775 = vunpack.c.l.b16 %v682
    %v776 = vunpack.c.l.b16 %v683
    %v777 = vpack.c.b16 %v762, %v761
    %v778 = vpack.c.b16 %v764, %v763
    %v779 = vpack.c.b16 %v766, %v765
    %v780 = vpack.c.b16 %v768, %v767
    %v781 = vpack.c.b16 %v770, %v769
    %v782 = vpack.c.b16 %v772, %v771
    %v783 = vpack.c.b16 %v774, %v773
    %v784 = vpack.c.b16 %v776, %v775
    %793 = vmatprep.subr.bf16.mxu0 0
    %794 = vmatpush1.bf16.msra.mxu0 %v777
    %795 = vmatprep.subr.bf16.mxu0 0
    %796 = vmatpush1.bf16.msra.mxu0 %v778
    %797 = vmatprep.subr.bf16.mxu0 0
    %798 = vmatpush1.bf16.msra.mxu0 %v779
    %799 = vmatprep.subr.bf16.mxu0 0
    %800 = vmatpush1.bf16.msra.mxu0 %v780
    %801 = vmatprep.subr.bf16.mxu0 0
    %802 = vmatpush1.bf16.msra.mxu0 %v781
    %803 = vmatprep.subr.bf16.mxu0 0
    %804 = vmatpush1.bf16.msra.mxu0 %v782
    %805 = vmatprep.subr.bf16.mxu0 0
    %806 = vmatpush1.bf16.msra.mxu0 %v783
    %807 = vmatprep.subr.bf16.mxu0 0
    %808 = vmatpush1.bf16.msra.mxu0 %v784
    %809 = vmatprep.subr.bf16.mxu0 0
    %810 = vmatpush1.bf16.msra.mxu0 0
    %811 = vmatprep.subr.bf16.mxu0 0
    %812 = vmatpush1.bf16.msra.mxu0 0
    %813 = vmatprep.subr.bf16.mxu0 0
    %814 = vmatpush1.bf16.msra.mxu0 0
    %815 = vmatprep.subr.bf16.mxu0 0
    %816 = vmatpush1.bf16.msra.mxu0 0
    %817 = vmatprep.subr.bf16.mxu0 0
    %818 = vmatpush1.bf16.msra.mxu0 0
    %819 = vmatprep.subr.bf16.mxu0 0
    %820 = vmatpush1.bf16.msra.mxu0 0
    %821 = vmatprep.subr.bf16.mxu0 0
    %822 = vmatpush1.bf16.msra.mxu0 0
    %823 = vmatprep.subr.bf16.mxu0 0
    %824 = vmatpush1.bf16.msra.mxu0 0
    %825 = vmatprep.mubr.bf16.mxu0 0
    %826 = vmatmul.mubr.bf16.gmra.mrb[0].mxu0 %v667
    %v827 = vpop.f32.mrb[0].mxu0
    %v828 = vadd.f32 %v740, %v827
    %v829 = vpop.f32.mrb[0].mxu0
    %v830 = vpop.f32.mrb[0].mxu0
    %v831 = vpop.f32.mrb[0].mxu0
    %832 = vdwg.mxu0
    %v833 = vld [vmem:[%s9] sm:$0x1]
    %v835 = vlaneseq
    %v836 = vshrl.u32 %v835, 7
    %v837 = vsub.s32 0, %v836
    %v838 = vrot.slane %v833, %v837
    %v840 = vadd.f32 %v828, %v838
    %v841 = vmax.f32 %v840, 0.0
    %842 = vst [vmem:[#allocation13] sm:$0xff] %v841
    // Predicated region
    $region66: #{caser_pallas.1} parent=1 // pred_check
      _
    $region67: #{caser_pallas.1} parent=1 // pred_check_branch
      %844 = sbr.rel (0) target = $region69
    $region68: #{caser_pallas.1} parent=1 // pred_region
      %s846 = ssub.s32 128, 128
      %847 = vsyncadd [#allocation4], %s846
      %s849 = sshll.u32 [#allocation13], 4
      %s850 = int_to_ptr.vmem [resolvable:$true] %s849
      %852 = dma.vmem_to_hbm [thread:$0]  %s850, 128, %s10, [#allocation4]
    $region69: #{caser_pallas.1} parent=1 // pred_fallthru
      _
    // Predicated region
    $region70: #{caser_pallas.1} parent=1 // pred_check
      _
    $region71: #{caser_pallas.1} parent=1 // pred_check_branch
      %854 = sbr.rel (0) target = $region73
    $region72: #{caser_pallas.1} parent=1 // pred_region
      %855 = dma.done [#allocation4], 128
    $region73: #{caser_pallas.1} parent=1 // pred_fallthru
      _
    %856 = vsyncpa [#allocation3], 1
    %857 = vsyncpa [#allocation6], 1
    %858 = vsyncpa [#allocation9], 1
    %859 = vsyncpa [#allocation12], 1
    %860 = vsyncpa [#allocation4], 1

</llo_original>
